<compile_context>
chip_gen: v7x
topology: tpu7x:2x2x1
jax: 0.10.0
libtpu: 0.0.40
codegen_flags: <defaults>
</compile_context>

<pallas_src>
import functools

import numpy as np
import jax
import jax.numpy as jnp
from jax import lax
from jax.experimental import pallas as pl
from jax.experimental.pallas import tpu as pltpu


# -----------------------------------------------------------------------------
# Kernel
# -----------------------------------------------------------------------------
def updown_kernel(x_ref, ptab_ref, wm_ref, y_ref, *,
                  same, c_in, mid, c_out, img_w):
    L = x_ref.shape[1]                         # B_TILE * H * W (lane-dense)
    x = x_ref[...]                             # (c_in, L)

    # Packed per-channel parameter table (BN already folded into pointwise).
    w1 = ptab_ref[0:mid, 0:c_in]                       # (mid, c_in)
    b1 = ptab_ref[0:mid, c_in:c_in + 1]                # (mid, 1)
    db1 = ptab_ref[0:mid, c_in + 1:c_in + 2]           # (mid, 1)
    w2 = ptab_ref[mid:mid + c_out, 0:mid]              # (c_out, mid)
    b2 = ptab_ref[mid:mid + c_out, mid:mid + 1]        # (c_out, 1)
    db2 = ptab_ref[mid:mid + c_out, mid + 1:mid + 2]   # (c_out, 1)

    def pointwise(h, wt, b_col, n_in, n_out):
        # 1x1 conv: out[co,:] = b[co] + sum_ci wt[co,ci] * h[ci,:]
        # tiny channel counts -> unrolled VPU broadcast-MACs (MXU stays idle).
        acc = jnp.broadcast_to(b_col, (n_out, L))
        for ci in range(n_in):
            acc = acc + wt[:, ci:ci + 1] * h[ci:ci + 1, :]
        return acc

    def depthwise3x3(h, row_lo, row_hi, db_col):
        # 3x3 depthwise (stride 1, pad 1) on the lane-packed spatial axis.
        # Each tap = one static lane rotation (XLU) of the whole slab times a
        # pre-masked per-channel tap weight (boundary mask folded in on the
        # host).  Cross-image / out-of-image lanes are exactly the masked ones.
        n_ch = row_hi - row_lo
        parts = [jnp.broadcast_to(db_col, (n_ch, L)), None, None]
        t = 0
        for oy in (-1, 0, 1):
            for ox in (-1, 0, 1):
                d = oy * img_w + ox
                sh = h if d == 0 else pltpu.roll(h, shift=(-d) % L, axis=1)
                term = sh * wm_ref[t, row_lo:row_hi, :]
                k = t % 3
                parts[k] = term if parts[k] is None else parts[k] + term
                t += 1
        return parts[0] + (parts[1] + parts[2])

    # ReLU -> (BN1 folded) -> pointwise1 -> depthwise1 ; Dropout = identity.
    h = jnp.maximum(x, 0.0)
    h = pointwise(h, w1, b1, c_in, mid)
    h = depthwise3x3(h, 0, mid, db1)

    # ReLU -> (BN2 folded) -> pointwise2 -> depthwise2 ; Dropout = identity.
    h = jnp.maximum(h, 0.0)
    h = pointwise(h, w2, b2, mid, c_out)
    y = depthwise3x3(h, mid, mid + c_out, db2)

    if same:
        y = y * jax.nn.sigmoid(y) + x          # SiLU(y) + residual
    y_ref[...] = y.astype(y_ref.dtype)


# -----------------------------------------------------------------------------
# One-time constant preparation (cache & reuse across calls)
# -----------------------------------------------------------------------------
def _tap_masks(h, w):
    """(9, H*W) float32 0/1 masks marking in-image taps for each 3x3 offset."""
    hw = h * w
    hi, wi = np.divmod(np.arange(hw), w)
    rows = []
    for oy in (-1, 0, 1):
        for ox in (-1, 0, 1):
            valid = ((hi + oy >= 0) & (hi + oy < h) &
                     (wi + ox >= 0) & (wi + ox < w))
            rows.append(valid.astype(np.float32))
    return np.stack(rows, axis=0)


def _pick_b_tile(n, hw, target_steps=4, max_lanes=4096):
    """Largest batch tile (divisor of n) keeping >= target_steps grid steps
    (>= 2 per v7x TensorCore) and <= max_lanes lanes per block (VMEM budget
    stays far below the 16 MiB v5e scoped default)."""
    max_b = max(1, min(n, max_lanes // hw))
    cands = [b for b in range(1, max_b + 1) if n % b == 0]
    good = [b for b in cands if n // b >= target_steps]
    return max(good) if good else max(cands)


def prepare_updown_constants(params, h, w, n):
    """Done ONCE per (params, H, W, N): fold BN into the pointwise convs, pack
    all per-channel params into one table, and pre-mask the depthwise taps."""
    hw = h * w
    b_tile = _pick_b_tile(n, hw)
    c_in, mid = params["pw1_w"].shape
    c_out = params["pw2_w"].shape[1]

    # Fold BN into the pointwise convs (exact in eval mode):
    #   W' @ relu(x) + b'  with  W' = W^T * s,  b' = b + W^T @ t.
    w1p = params["pw1_w"].T * params["s1"][None, :]
    b1p = params["pw1_b"] + params["pw1_w"].T @ params["t1"]
    w2p = params["pw2_w"].T * params["s2"][None, :]
    b2p = params["pw2_b"] + params["pw2_w"].T @ params["t2"]

    # One packed per-channel parameter table (one DMA stream instead of ~12).
    K = max(c_in, mid) + 2
    ptab = jnp.zeros((mid + c_out, K), jnp.float32)
    ptab = ptab.at[:mid, :c_in].set(w1p)
    ptab = ptab.at[:mid, c_in].set(b1p)
    ptab = ptab.at[:mid, c_in + 1].set(params["dw1_b"])
    ptab = ptab.at[mid:, :mid].set(w2p)
    ptab = ptab.at[mid:, mid].set(b2p)
    ptab = ptab.at[mid:, mid + 1].set(params["dw2_b"])

    # Pre-masked depthwise taps, per-image mask tiled over the batch tile:
    # wm[t, c, lane] = dw_w[c, tap t] * in_image_mask[tap t, lane].
    masks = jnp.asarray(np.tile(_tap_masks(h, w), (1, b_tile)))      # (9, L)
    taps1 = jnp.transpose(params["dw1_w"], (2, 0, 1)).reshape(mid, 9)
    taps2 = jnp.transpose(params["dw2_w"], (2, 0, 1)).reshape(c_out, 9)
    wm1 = taps1.T[:, :, None] * masks[:, None, :]                    # (9,mid,L)
    wm2 = taps2.T[:, :, None] * masks[:, None, :]                    # (9,cout,L)
    wm = jnp.concatenate([wm1, wm2], axis=1)                         # (9,mid+cout,L)

    return dict(ptab=ptab, wm=wm, b_tile=b_tile,
                c_in=c_in, mid=mid, c_out=c_out)


# -----------------------------------------------------------------------------
# Wrapper
# -----------------------------------------------------------------------------
def updown_block(x_nchw, consts, *, same):
    # TODO(synk): eval-mode only (Dropout = identity, BN running stats folded);
    # only the module defaults kernel_size=3, stride=1, padding=1 implemented.
    n, c_in, h, w = x_nchw.shape
    hw = h * w
    b_tile, mid, c_out = consts["b_tile"], consts["mid"], consts["c_out"]
    assert c_in == consts["c_in"] and n % b_tile == 0
    L = b_tile * hw
    steps = n // b_tile

    # Lane-pack the batch: (N,C,H,W) -> (C, N*HW).  One tiny XLA transpose on
    # each side; in-kernel everything is a lane-dense 2-D slab (L multiple of
    # 128 when H*W is), so the output store is an unmasked full-lane vst.
    x = jnp.transpose(x_nchw.reshape(n, c_in, hw), (1, 0, 2)).reshape(c_in, n * hw)

    kernel = functools.partial(updown_kernel, same=same,
                               c_in=c_in, mid=mid, c_out=c_out, img_w=w)

    # VMEM budget (f32, 2x-buffered blocks): x/y ~ 2*(c_in+c_out)*L*4,
    # wm ~ 2*9*(mid+c_out)*L*4, + a few (mid, L) intermediates.  With L <= 4096
    # this is < 5 MiB — well under the 16 MiB (v5e) / 32 MiB (v6e/v7x) scoped
    # defaults, so no vmem_limit_bytes override is needed.
    y = pl.pallas_call(
        kernel,
        out_shape=jax.ShapeDtypeStruct((c_out, n * hw), jnp.float32),
        grid_spec=pltpu.PrefetchScalarGridSpec(
            num_scalar_prefetch=0,
            grid=(steps,),   # batch-tile axis; "parallel" -> shards over TCs
            in_specs=[
                pl.BlockSpec((c_in, L), lambda i: (0, i)),
                pl.BlockSpec(consts["ptab"].shape, lambda i: (0, 0)),
                pl.BlockSpec(consts["wm"].shape, lambda i: (0, 0, 0)),
            ],
            out_specs=pl.BlockSpec((c_out, L), lambda i: (0, i)),
        ),
        compiler_params=pltpu.CompilerParams(dimension_semantics=("parallel",)),
    )(x, consts["ptab"], consts["wm"])

    return jnp.transpose(y.reshape(c_out, n, hw), (1, 0, 2)).reshape(n, c_out, h, w)


# -----------------------------------------------------------------------------
# Deterministic parameter construction (synthetic; BN running stats as s,t)
# -----------------------------------------------------------------------------
def make_params(key, c_in, c_out, scale=2, eps=1e-5):
    mid = int(c_out * scale)
    ks = jax.random.split(key, 16)

    def bn_fold(i0, c):
        gamma = 1.0 + 0.1 * jax.random.normal(ks[i0 + 0], (c,), jnp.float32)
        beta = 0.1 * jax.random.normal(ks[i0 + 1], (c,), jnp.float32)
        mean = 0.1 * jax.random.normal(ks[i0 + 2], (c,), jnp.float32)
        var = jax.random.uniform(ks[i0 + 3], (c,), jnp.float32, 0.5, 1.5)
        s = gamma * lax.rsqrt(var + eps)
        t = beta - mean * s
        return s, t

    s1, t1 = bn_fold(0, c_in)
    s2, t2 = bn_fold(4, mid)
    return dict(
        s1=s1, t1=t1, s2=s2, t2=t2,
        pw1_w=0.3 * jax.random.normal(ks[8], (c_in, mid), jnp.float32),
        pw1_b=0.1 * jax.random.normal(ks[9], (mid,), jnp.float32),
        dw1_w=0.3 * jax.random.normal(ks[10], (3, 3, mid), jnp.float32),
        dw1_b=0.1 * jax.random.normal(ks[11], (mid,), jnp.float32),
        pw2_w=0.3 * jax.random.normal(ks[12], (mid, c_out), jnp.float32),
        pw2_b=0.1 * jax.random.normal(ks[13], (c_out,), jnp.float32),
        dw2_w=0.3 * jax.random.normal(ks[14], (3, 3, c_out), jnp.float32),
        dw2_b=0.1 * jax.random.normal(ks[15], (c_out,), jnp.float32),
    )


# -----------------------------------------------------------------------------
# Pure-JAX reference (NCHW, lax.conv) for correctness check
# -----------------------------------------------------------------------------
def reference_forward(x, params, *, same):
    def bn(h, s, t):
        return h * s.reshape(1, -1, 1, 1) + t.reshape(1, -1, 1, 1)

    def pointwise(h, w, b):
        kern = jnp.transpose(w)[:, :, None, None]               # (Cout,Cin,1,1)
        return lax.conv_general_dilated(h, kern, (1, 1), "VALID") \
            + b.reshape(1, -1, 1, 1)

    def depthwise(h, w, b):
        c = h.shape[1]
        kern = jnp.transpose(w, (2, 0, 1))[:, None, :, :]       # (C,1,3,3)
        return lax.conv_general_dilated(h, kern, (1, 1), ((1, 1), (1, 1)),
                                        feature_group_count=c) \
            + b.reshape(1, -1, 1, 1)

    h = bn(jnp.maximum(x, 0.0), params["s1"], params["t1"])
    h = depthwise(pointwise(h, params["pw1_w"], params["pw1_b"]),
                  params["dw1_w"], params["dw1_b"])
    h = bn(jnp.maximum(h, 0.0), params["s2"], params["t2"])
    y = depthwise(pointwise(h, params["pw2_w"], params["pw2_b"]),
                  params["dw2_w"], params["dw2_b"])
    if same:
        y = y * jax.nn.sigmoid(y) + x
    return y


if __name__ == "__main__":
    key = jax.random.PRNGKey(0)
    k_x, k_p = jax.random.split(key)

    c_in, c_out, scale = 4, 4, 2                  # same-shape branch (residual)
    x = jax.random.normal(k_x, (2, c_in, 16, 16), jnp.float32)   # NCHW
    params = make_params(k_p, c_in, c_out, scale)
    same = (c_in == c_out)                        # stride == 1 (module default)

    consts = prepare_updown_constants(params, 16, 16, x.shape[0])  # cache this
    y = updown_block(x, consts, same=same)
    jax.block_until_ready(y)

    y_ref = reference_forward(x, params, same=same)
    assert y.shape == y_ref.shape
    err = float(jnp.max(jnp.abs(y - y_ref)))
    assert jnp.allclose(y, y_ref, atol=1e-3, rtol=1e-3), f"max abs err {err}"
    print("KERNEL_OK")
</pallas_src>

<mosaic_0001>
module attributes {stable_mosaic.version = 11 : i64} {
  func.func @updown_kernel(%arg0: i32, %arg1: memref<4x512xf32, #tpu.memory_space<vmem>>, %arg2: memref<12x10xf32, #tpu.memory_space<vmem>>, %arg3: memref<9x12x512xf32, #tpu.memory_space<vmem>>, %arg4: memref<4x512xf32, #tpu.memory_space<vmem>>) attributes {dimension_semantics = [#tpu.dimension_semantics<parallel>], iteration_bounds = array<i64: 1>, scalar_prefetch = 0 : i64, scratch_operands = 0 : i64, tpu.core_type = #tpu.core_type<tc>, window_params = [{transform_indices = @transform_0, window_bounds = array<i64: 4, 512>}, {pipeline_mode = #tpu.pipeline_mode<synchronous>, transform_indices = @transform_1, window_bounds = array<i64: 12, 10>}, {pipeline_mode = #tpu.pipeline_mode<synchronous>, transform_indices = @transform_2, window_bounds = array<i64: 9, 12, 512>}, {transform_indices = @transform_3, window_bounds = array<i64: 4, 512>}]} {
    %c0 = arith.constant 0 : index
    %c0_0 = arith.constant 0 : index
    %0 = vector.load %arg1[%c0, %c0_0] : memref<4x512xf32, #tpu.memory_space<vmem>>, vector<4x512xf32>
    %c0_1 = arith.constant 0 : index
    %c0_2 = arith.constant 0 : index
    %1 = vector.load %arg2[%c0_1, %c0_2] : memref<12x10xf32, #tpu.memory_space<vmem>>, vector<8x4xf32>
    %c0_3 = arith.constant 0 : index
    %c4 = arith.constant 4 : index
    %2 = vector.load %arg2[%c0_3, %c4] : memref<12x10xf32, #tpu.memory_space<vmem>>, vector<8x1xf32>
    %c0_4 = arith.constant 0 : index
    %c5 = arith.constant 5 : index
    %3 = vector.load %arg2[%c0_4, %c5] : memref<12x10xf32, #tpu.memory_space<vmem>>, vector<8x1xf32>
    %c8 = arith.constant 8 : index
    %c0_5 = arith.constant 0 : index
    %4 = vector.load %arg2[%c8, %c0_5] : memref<12x10xf32, #tpu.memory_space<vmem>>, vector<4x8xf32>
    %c8_6 = arith.constant 8 : index
    %c8_7 = arith.constant 8 : index
    %5 = vector.load %arg2[%c8_6, %c8_7] : memref<12x10xf32, #tpu.memory_space<vmem>>, vector<4x1xf32>
    %c8_8 = arith.constant 8 : index
    %c9 = arith.constant 9 : index
    %6 = vector.load %arg2[%c8_8, %c9] : memref<12x10xf32, #tpu.memory_space<vmem>>, vector<4x1xf32>
    %cst = arith.constant 0.000000e+00 : f32
    %7 = vector.broadcast %cst : f32 to vector<4x512xf32>
    %8 = arith.maximumf %0, %7 : vector<4x512xf32>
    %9 = vector.shape_cast %2 : vector<8x1xf32> to vector<8x1xf32>
    %10 = vector.broadcast %9 : vector<8x1xf32> to vector<8x512xf32>
    %11 = vector.extract_strided_slice %1 {offsets = [0, 0], sizes = [8, 1], strides = [1, 1]} : vector<8x4xf32> to vector<8x1xf32>
    %12 = vector.extract_strided_slice %8 {offsets = [0, 0], sizes = [1, 512], strides = [1, 1]} : vector<4x512xf32> to vector<1x512xf32>
    %13 = vector.broadcast %11 : vector<8x1xf32> to vector<8x512xf32>
    %14 = vector.broadcast %12 : vector<1x512xf32> to vector<8x512xf32>
    %15 = arith.mulf %13, %14 : vector<8x512xf32>
    %16 = arith.addf %10, %15 : vector<8x512xf32>
    %17 = vector.extract_strided_slice %1 {offsets = [0, 1], sizes = [8, 1], strides = [1, 1]} : vector<8x4xf32> to vector<8x1xf32>
    %18 = vector.extract_strided_slice %8 {offsets = [1, 0], sizes = [1, 512], strides = [1, 1]} : vector<4x512xf32> to vector<1x512xf32>
    %19 = vector.broadcast %17 : vector<8x1xf32> to vector<8x512xf32>
    %20 = vector.broadcast %18 : vector<1x512xf32> to vector<8x512xf32>
    %21 = arith.mulf %19, %20 : vector<8x512xf32>
    %22 = arith.addf %16, %21 : vector<8x512xf32>
    %23 = vector.extract_strided_slice %1 {offsets = [0, 2], sizes = [8, 1], strides = [1, 1]} : vector<8x4xf32> to vector<8x1xf32>
    %24 = vector.extract_strided_slice %8 {offsets = [2, 0], sizes = [1, 512], strides = [1, 1]} : vector<4x512xf32> to vector<1x512xf32>
    %25 = vector.broadcast %23 : vector<8x1xf32> to vector<8x512xf32>
    %26 = vector.broadcast %24 : vector<1x512xf32> to vector<8x512xf32>
    %27 = arith.mulf %25, %26 : vector<8x512xf32>
    %28 = arith.addf %22, %27 : vector<8x512xf32>
    %29 = vector.extract_strided_slice %1 {offsets = [0, 3], sizes = [8, 1], strides = [1, 1]} : vector<8x4xf32> to vector<8x1xf32>
    %30 = vector.extract_strided_slice %8 {offsets = [3, 0], sizes = [1, 512], strides = [1, 1]} : vector<4x512xf32> to vector<1x512xf32>
    %31 = vector.broadcast %29 : vector<8x1xf32> to vector<8x512xf32>
    %32 = vector.broadcast %30 : vector<1x512xf32> to vector<8x512xf32>
    %33 = arith.mulf %31, %32 : vector<8x512xf32>
    %34 = arith.addf %28, %33 : vector<8x512xf32>
    %35 = vector.shape_cast %3 : vector<8x1xf32> to vector<8x1xf32>
    %36 = vector.broadcast %35 : vector<8x1xf32> to vector<8x512xf32>
    %c17_i32 = arith.constant 17 : i32
    %37 = tpu.dynamic_rotate %34 by %c17_i32 dim 1 : vector<8x512xf32>, i32 -> vector<8x512xf32>
    %c0_9 = arith.constant 0 : index
    %c0_10 = arith.constant 0 : index
    %c0_11 = arith.constant 0 : index
    %38 = vector.load %arg3[%c0_9, %c0_10, %c0_11] : memref<9x12x512xf32, #tpu.memory_space<vmem>>, vector<1x8x512xf32>
    %39 = vector.shape_cast %38 : vector<1x8x512xf32> to vector<8x512xf32>
    %40 = arith.mulf %37, %39 : vector<8x512xf32>
    %41 = arith.addf %36, %40 : vector<8x512xf32>
    %c16_i32 = arith.constant 16 : i32
    %42 = tpu.dynamic_rotate %34 by %c16_i32 dim 1 : vector<8x512xf32>, i32 -> vector<8x512xf32>
    %c1 = arith.constant 1 : index
    %c0_12 = arith.constant 0 : index
    %c0_13 = arith.constant 0 : index
    %43 = vector.load %arg3[%c1, %c0_12, %c0_13] : memref<9x12x512xf32, #tpu.memory_space<vmem>>, vector<1x8x512xf32>
    %44 = vector.shape_cast %43 : vector<1x8x512xf32> to vector<8x512xf32>
    %45 = arith.mulf %42, %44 : vector<8x512xf32>
    %c15_i32 = arith.constant 15 : i32
    %46 = tpu.dynamic_rotate %34 by %c15_i32 dim 1 : vector<8x512xf32>, i32 -> vector<8x512xf32>
    %c2 = arith.constant 2 : index
    %c0_14 = arith.constant 0 : index
    %c0_15 = arith.constant 0 : index
    %47 = vector.load %arg3[%c2, %c0_14, %c0_15] : memref<9x12x512xf32, #tpu.memory_space<vmem>>, vector<1x8x512xf32>
    %48 = vector.shape_cast %47 : vector<1x8x512xf32> to vector<8x512xf32>
    %49 = arith.mulf %46, %48 : vector<8x512xf32>
    %c1_i32 = arith.constant 1 : i32
    %50 = tpu.dynamic_rotate %34 by %c1_i32 dim 1 : vector<8x512xf32>, i32 -> vector<8x512xf32>
    %c3 = arith.constant 3 : index
    %c0_16 = arith.constant 0 : index
    %c0_17 = arith.constant 0 : index
    %51 = vector.load %arg3[%c3, %c0_16, %c0_17] : memref<9x12x512xf32, #tpu.memory_space<vmem>>, vector<1x8x512xf32>
    %52 = vector.shape_cast %51 : vector<1x8x512xf32> to vector<8x512xf32>
    %53 = arith.mulf %50, %52 : vector<8x512xf32>
    %54 = arith.addf %41, %53 : vector<8x512xf32>
    %c4_18 = arith.constant 4 : index
    %c0_19 = arith.constant 0 : index
    %c0_20 = arith.constant 0 : index
    %55 = vector.load %arg3[%c4_18, %c0_19, %c0_20] : memref<9x12x512xf32, #tpu.memory_space<vmem>>, vector<1x8x512xf32>
    %56 = vector.shape_cast %55 : vector<1x8x512xf32> to vector<8x512xf32>
    %57 = arith.mulf %34, %56 : vector<8x512xf32>
    %58 = arith.addf %45, %57 : vector<8x512xf32>
    %c511_i32 = arith.constant 511 : i32
    %59 = tpu.dynamic_rotate %34 by %c511_i32 dim 1 : vector<8x512xf32>, i32 -> vector<8x512xf32>
    %c5_21 = arith.constant 5 : index
    %c0_22 = arith.constant 0 : index
    %c0_23 = arith.constant 0 : index
    %60 = vector.load %arg3[%c5_21, %c0_22, %c0_23] : memref<9x12x512xf32, #tpu.memory_space<vmem>>, vector<1x8x512xf32>
    %61 = vector.shape_cast %60 : vector<1x8x512xf32> to vector<8x512xf32>
    %62 = arith.mulf %59, %61 : vector<8x512xf32>
    %63 = arith.addf %49, %62 : vector<8x512xf32>
    %c497_i32 = arith.constant 497 : i32
    %64 = tpu.dynamic_rotate %34 by %c497_i32 dim 1 : vector<8x512xf32>, i32 -> vector<8x512xf32>
    %c6 = arith.constant 6 : index
    %c0_24 = arith.constant 0 : index
    %c0_25 = arith.constant 0 : index
    %65 = vector.load %arg3[%c6, %c0_24, %c0_25] : memref<9x12x512xf32, #tpu.memory_space<vmem>>, vector<1x8x512xf32>
    %66 = vector.shape_cast %65 : vector<1x8x512xf32> to vector<8x512xf32>
    %67 = arith.mulf %64, %66 : vector<8x512xf32>
    %68 = arith.addf %54, %67 : vector<8x512xf32>
    %c496_i32 = arith.constant 496 : i32
    %69 = tpu.dynamic_rotate %34 by %c496_i32 dim 1 : vector<8x512xf32>, i32 -> vector<8x512xf32>
    %c7 = arith.constant 7 : index
    %c0_26 = arith.constant 0 : index
    %c0_27 = arith.constant 0 : index
    %70 = vector.load %arg3[%c7, %c0_26, %c0_27] : memref<9x12x512xf32, #tpu.memory_space<vmem>>, vector<1x8x512xf32>
    %71 = vector.shape_cast %70 : vector<1x8x512xf32> to vector<8x512xf32>
    %72 = arith.mulf %69, %71 : vector<8x512xf32>
    %73 = arith.addf %58, %72 : vector<8x512xf32>
    %c495_i32 = arith.constant 495 : i32
    %74 = tpu.dynamic_rotate %34 by %c495_i32 dim 1 : vector<8x512xf32>, i32 -> vector<8x512xf32>
    %c8_28 = arith.constant 8 : index
    %c0_29 = arith.constant 0 : index
    %c0_30 = arith.constant 0 : index
    %75 = vector.load %arg3[%c8_28, %c0_29, %c0_30] : memref<9x12x512xf32, #tpu.memory_space<vmem>>, vector<1x8x512xf32>
    %76 = vector.shape_cast %75 : vector<1x8x512xf32> to vector<8x512xf32>
    %77 = arith.mulf %74, %76 : vector<8x512xf32>
    %78 = arith.addf %63, %77 : vector<8x512xf32>
    %79 = arith.addf %73, %78 : vector<8x512xf32>
    %80 = arith.addf %68, %79 : vector<8x512xf32>
    %cst_31 = arith.constant 0.000000e+00 : f32
    %81 = vector.broadcast %cst_31 : f32 to vector<8x512xf32>
    %82 = arith.maximumf %80, %81 : vector<8x512xf32>
    %83 = vector.shape_cast %5 : vector<4x1xf32> to vector<4x1xf32>
    %84 = vector.broadcast %83 : vector<4x1xf32> to vector<4x512xf32>
    %85 = vector.extract_strided_slice %4 {offsets = [0, 0], sizes = [4, 1], strides = [1, 1]} : vector<4x8xf32> to vector<4x1xf32>
    %86 = vector.extract_strided_slice %82 {offsets = [0, 0], sizes = [1, 512], strides = [1, 1]} : vector<8x512xf32> to vector<1x512xf32>
    %87 = vector.broadcast %85 : vector<4x1xf32> to vector<4x512xf32>
    %88 = vector.broadcast %86 : vector<1x512xf32> to vector<4x512xf32>
    %89 = arith.mulf %87, %88 : vector<4x512xf32>
    %90 = arith.addf %84, %89 : vector<4x512xf32>
    %91 = vector.extract_strided_slice %4 {offsets = [0, 1], sizes = [4, 1], strides = [1, 1]} : vector<4x8xf32> to vector<4x1xf32>
    %92 = vector.extract_strided_slice %82 {offsets = [1, 0], sizes = [1, 512], strides = [1, 1]} : vector<8x512xf32> to vector<1x512xf32>
    %93 = vector.broadcast %91 : vector<4x1xf32> to vector<4x512xf32>
    %94 = vector.broadcast %92 : vector<1x512xf32> to vector<4x512xf32>
    %95 = arith.mulf %93, %94 : vector<4x512xf32>
    %96 = arith.addf %90, %95 : vector<4x512xf32>
    %97 = vector.extract_strided_slice %4 {offsets = [0, 2], sizes = [4, 1], strides = [1, 1]} : vector<4x8xf32> to vector<4x1xf32>
    %98 = vector.extract_strided_slice %82 {offsets = [2, 0], sizes = [1, 512], strides = [1, 1]} : vector<8x512xf32> to vector<1x512xf32>
    %99 = vector.broadcast %97 : vector<4x1xf32> to vector<4x512xf32>
    %100 = vector.broadcast %98 : vector<1x512xf32> to vector<4x512xf32>
    %101 = arith.mulf %99, %100 : vector<4x512xf32>
    %102 = arith.addf %96, %101 : vector<4x512xf32>
    %103 = vector.extract_strided_slice %4 {offsets = [0, 3], sizes = [4, 1], strides = [1, 1]} : vector<4x8xf32> to vector<4x1xf32>
    %104 = vector.extract_strided_slice %82 {offsets = [3, 0], sizes = [1, 512], strides = [1, 1]} : vector<8x512xf32> to vector<1x512xf32>
    %105 = vector.broadcast %103 : vector<4x1xf32> to vector<4x512xf32>
    %106 = vector.broadcast %104 : vector<1x512xf32> to vector<4x512xf32>
    %107 = arith.mulf %105, %106 : vector<4x512xf32>
    %108 = arith.addf %102, %107 : vector<4x512xf32>
    %109 = vector.extract_strided_slice %4 {offsets = [0, 4], sizes = [4, 1], strides = [1, 1]} : vector<4x8xf32> to vector<4x1xf32>
    %110 = vector.extract_strided_slice %82 {offsets = [4, 0], sizes = [1, 512], strides = [1, 1]} : vector<8x512xf32> to vector<1x512xf32>
    %111 = vector.broadcast %109 : vector<4x1xf32> to vector<4x512xf32>
    %112 = vector.broadcast %110 : vector<1x512xf32> to vector<4x512xf32>
    %113 = arith.mulf %111, %112 : vector<4x512xf32>
    %114 = arith.addf %108, %113 : vector<4x512xf32>
    %115 = vector.extract_strided_slice %4 {offsets = [0, 5], sizes = [4, 1], strides = [1, 1]} : vector<4x8xf32> to vector<4x1xf32>
    %116 = vector.extract_strided_slice %82 {offsets = [5, 0], sizes = [1, 512], strides = [1, 1]} : vector<8x512xf32> to vector<1x512xf32>
    %117 = vector.broadcast %115 : vector<4x1xf32> to vector<4x512xf32>
    %118 = vector.broadcast %116 : vector<1x512xf32> to vector<4x512xf32>
    %119 = arith.mulf %117, %118 : vector<4x512xf32>
    %120 = arith.addf %114, %119 : vector<4x512xf32>
    %121 = vector.extract_strided_slice %4 {offsets = [0, 6], sizes = [4, 1], strides = [1, 1]} : vector<4x8xf32> to vector<4x1xf32>
    %122 = vector.extract_strided_slice %82 {offsets = [6, 0], sizes = [1, 512], strides = [1, 1]} : vector<8x512xf32> to vector<1x512xf32>
    %123 = vector.broadcast %121 : vector<4x1xf32> to vector<4x512xf32>
    %124 = vector.broadcast %122 : vector<1x512xf32> to vector<4x512xf32>
    %125 = arith.mulf %123, %124 : vector<4x512xf32>
    %126 = arith.addf %120, %125 : vector<4x512xf32>
    %127 = vector.extract_strided_slice %4 {offsets = [0, 7], sizes = [4, 1], strides = [1, 1]} : vector<4x8xf32> to vector<4x1xf32>
    %128 = vector.extract_strided_slice %82 {offsets = [7, 0], sizes = [1, 512], strides = [1, 1]} : vector<8x512xf32> to vector<1x512xf32>
    %129 = vector.broadcast %127 : vector<4x1xf32> to vector<4x512xf32>
    %130 = vector.broadcast %128 : vector<1x512xf32> to vector<4x512xf32>
    %131 = arith.mulf %129, %130 : vector<4x512xf32>
    %132 = arith.addf %126, %131 : vector<4x512xf32>
    %133 = vector.shape_cast %6 : vector<4x1xf32> to vector<4x1xf32>
    %134 = vector.broadcast %133 : vector<4x1xf32> to vector<4x512xf32>
    %c17_i32_32 = arith.constant 17 : i32
    %135 = tpu.dynamic_rotate %132 by %c17_i32_32 dim 1 : vector<4x512xf32>, i32 -> vector<4x512xf32>
    %c0_33 = arith.constant 0 : index
    %c8_34 = arith.constant 8 : index
    %c0_35 = arith.constant 0 : index
    %136 = vector.load %arg3[%c0_33, %c8_34, %c0_35] : memref<9x12x512xf32, #tpu.memory_space<vmem>>, vector<1x4x512xf32>
    %137 = vector.shape_cast %136 : vector<1x4x512xf32> to vector<4x512xf32>
    %138 = arith.mulf %135, %137 : vector<4x512xf32>
    %139 = arith.addf %134, %138 : vector<4x512xf32>
    %c16_i32_36 = arith.constant 16 : i32
    %140 = tpu.dynamic_rotate %132 by %c16_i32_36 dim 1 : vector<4x512xf32>, i32 -> vector<4x512xf32>
    %c1_37 = arith.constant 1 : index
    %c8_38 = arith.constant 8 : index
    %c0_39 = arith.constant 0 : index
    %141 = vector.load %arg3[%c1_37, %c8_38, %c0_39] : memref<9x12x512xf32, #tpu.memory_space<vmem>>, vector<1x4x512xf32>
    %142 = vector.shape_cast %141 : vector<1x4x512xf32> to vector<4x512xf32>
    %143 = arith.mulf %140, %142 : vector<4x512xf32>
    %c15_i32_40 = arith.constant 15 : i32
    %144 = tpu.dynamic_rotate %132 by %c15_i32_40 dim 1 : vector<4x512xf32>, i32 -> vector<4x512xf32>
    %c2_41 = arith.constant 2 : index
    %c8_42 = arith.constant 8 : index
    %c0_43 = arith.constant 0 : index
    %145 = vector.load %arg3[%c2_41, %c8_42, %c0_43] : memref<9x12x512xf32, #tpu.memory_space<vmem>>, vector<1x4x512xf32>
    %146 = vector.shape_cast %145 : vector<1x4x512xf32> to vector<4x512xf32>
    %147 = arith.mulf %144, %146 : vector<4x512xf32>
    %c1_i32_44 = arith.constant 1 : i32
    %148 = tpu.dynamic_rotate %132 by %c1_i32_44 dim 1 : vector<4x512xf32>, i32 -> vector<4x512xf32>
    %c3_45 = arith.constant 3 : index
    %c8_46 = arith.constant 8 : index
    %c0_47 = arith.constant 0 : index
    %149 = vector.load %arg3[%c3_45, %c8_46, %c0_47] : memref<9x12x512xf32, #tpu.memory_space<vmem>>, vector<1x4x512xf32>
    %150 = vector.shape_cast %149 : vector<1x4x512xf32> to vector<4x512xf32>
    %151 = arith.mulf %148, %150 : vector<4x512xf32>
    %152 = arith.addf %139, %151 : vector<4x512xf32>
    %c4_48 = arith.constant 4 : index
    %c8_49 = arith.constant 8 : index
    %c0_50 = arith.constant 0 : index
    %153 = vector.load %arg3[%c4_48, %c8_49, %c0_50] : memref<9x12x512xf32, #tpu.memory_space<vmem>>, vector<1x4x512xf32>
    %154 = vector.shape_cast %153 : vector<1x4x512xf32> to vector<4x512xf32>
    %155 = arith.mulf %132, %154 : vector<4x512xf32>
    %156 = arith.addf %143, %155 : vector<4x512xf32>
    %c511_i32_51 = arith.constant 511 : i32
    %157 = tpu.dynamic_rotate %132 by %c511_i32_51 dim 1 : vector<4x512xf32>, i32 -> vector<4x512xf32>
    %c5_52 = arith.constant 5 : index
    %c8_53 = arith.constant 8 : index
    %c0_54 = arith.constant 0 : index
    %158 = vector.load %arg3[%c5_52, %c8_53, %c0_54] : memref<9x12x512xf32, #tpu.memory_space<vmem>>, vector<1x4x512xf32>
    %159 = vector.shape_cast %158 : vector<1x4x512xf32> to vector<4x512xf32>
    %160 = arith.mulf %157, %159 : vector<4x512xf32>
    %161 = arith.addf %147, %160 : vector<4x512xf32>
    %c497_i32_55 = arith.constant 497 : i32
    %162 = tpu.dynamic_rotate %132 by %c497_i32_55 dim 1 : vector<4x512xf32>, i32 -> vector<4x512xf32>
    %c6_56 = arith.constant 6 : index
    %c8_57 = arith.constant 8 : index
    %c0_58 = arith.constant 0 : index
    %163 = vector.load %arg3[%c6_56, %c8_57, %c0_58] : memref<9x12x512xf32, #tpu.memory_space<vmem>>, vector<1x4x512xf32>
    %164 = vector.shape_cast %163 : vector<1x4x512xf32> to vector<4x512xf32>
    %165 = arith.mulf %162, %164 : vector<4x512xf32>
    %166 = arith.addf %152, %165 : vector<4x512xf32>
    %c496_i32_59 = arith.constant 496 : i32
    %167 = tpu.dynamic_rotate %132 by %c496_i32_59 dim 1 : vector<4x512xf32>, i32 -> vector<4x512xf32>
    %c7_60 = arith.constant 7 : index
    %c8_61 = arith.constant 8 : index
    %c0_62 = arith.constant 0 : index
    %168 = vector.load %arg3[%c7_60, %c8_61, %c0_62] : memref<9x12x512xf32, #tpu.memory_space<vmem>>, vector<1x4x512xf32>
    %169 = vector.shape_cast %168 : vector<1x4x512xf32> to vector<4x512xf32>
    %170 = arith.mulf %167, %169 : vector<4x512xf32>
    %171 = arith.addf %156, %170 : vector<4x512xf32>
    %c495_i32_63 = arith.constant 495 : i32
    %172 = tpu.dynamic_rotate %132 by %c495_i32_63 dim 1 : vector<4x512xf32>, i32 -> vector<4x512xf32>
    %c8_64 = arith.constant 8 : index
    %c8_65 = arith.constant 8 : index
    %c0_66 = arith.constant 0 : index
    %173 = vector.load %arg3[%c8_64, %c8_65, %c0_66] : memref<9x12x512xf32, #tpu.memory_space<vmem>>, vector<1x4x512xf32>
    %174 = vector.shape_cast %173 : vector<1x4x512xf32> to vector<4x512xf32>
    %175 = arith.mulf %172, %174 : vector<4x512xf32>
    %176 = arith.addf %161, %175 : vector<4x512xf32>
    %177 = arith.addf %171, %176 : vector<4x512xf32>
    %178 = arith.addf %166, %177 : vector<4x512xf32>
    %179 = arith.negf %178 : vector<4x512xf32>
    %180 = math.exp %179 : vector<4x512xf32>
    %cst_67 = arith.constant 1.000000e+00 : f32
    %181 = vector.broadcast %cst_67 : f32 to vector<4x512xf32>
    %182 = arith.addf %181, %180 : vector<4x512xf32>
    %183 = arith.divf %181, %182 : vector<4x512xf32>
    %184 = arith.mulf %178, %183 : vector<4x512xf32>
    %185 = arith.addf %184, %0 : vector<4x512xf32>
    %c0_68 = arith.constant 0 : index
    %c0_69 = arith.constant 0 : index
    %186 = vector.load %arg4[%c0_68, %c0_69] : memref<4x512xf32, #tpu.memory_space<vmem>>, vector<4x512xf32>
    tpu.vector_store %arg4[%c0_68, %c0_69], %185 {strides = array<i32>} : memref<4x512xf32, #tpu.memory_space<vmem>>, vector<4x512xf32>,
    return
  }
  func.func @transform_0(%arg0: i32) -> (i32, i32) {
    %c0_i32 = arith.constant 0 : i32
    %c0_i32_0 = arith.constant 0 : i32
    return %c0_i32, %arg0 : i32, i32
  }
  func.func @transform_1(%arg0: i32) -> (i32, i32) {
    %c0_i32 = arith.constant 0 : i32
    %c0_i32_0 = arith.constant 0 : i32
    %c0_i32_1 = arith.constant 0 : i32
    return %c0_i32, %c0_i32_0 : i32, i32
  }
  func.func @transform_2(%arg0: i32) -> (i32, i32, i32) {
    %c0_i32 = arith.constant 0 : i32
    %c0_i32_0 = arith.constant 0 : i32
    %c0_i32_1 = arith.constant 0 : i32
    %c0_i32_2 = arith.constant 0 : i32
    return %c0_i32, %c0_i32_0, %c0_i32_1 : i32, i32, i32
  }
  func.func @transform_3(%arg0: i32) -> (i32, i32) {
    %c0_i32 = arith.constant 0 : i32
    %c0_i32_0 = arith.constant 0 : i32
    return %c0_i32, %arg0 : i32, i32
  }
}

</mosaic_0001>

<llo_original>
// kernel: tpu_custom_call.1
$region0: #{tpu_custom_call.1}
  #allocation0 [shape = 'u32[]', space=smem, size = 0x4, offset = 0x4, fixed_abs, tag = 'smem constant byte address 0x4 - core index']
  #allocation1 [shape = 'u32[144,128]{1,0:T(1,128)}', space=vmem, size = 0x12000, scoped, tag = 'internal scratch']
  %s0 = inlined_call_operand.hbm [shape: f32[4,512], index: 0, kind: input, shape index: {}]
  %s1 = inlined_call_operand.hbm [shape: f32[12,10], index: 1, kind: input, shape index: {}]
  %s2 = inlined_call_operand.hbm [shape: f32[9,12,512], index: 2, kind: input, shape index: {}]
  %s3 = inlined_call_operand.hbm [shape: f32[4,512], index: 3, kind: output, shape index: {}]
  %s4 = sld [smem:[#allocation0]]
  $region34: #{tpu_custom_call.1} parent=0
    _
  %s6 = ssub.s32 1, %s4
  %s7 = scalar_select 0, %s6, %s4
  $region1: #{tpu_custom_call.1} parent=0
    #allocation2 [shape = 'u8[8192]{0}', space=vmem, size = 0x2000, scoped, tag = 'input window, operand 0, single buffered']
    #allocation3 [shape = 's32[1]{0}', space=sflag, size = 0x4, scoped, tag = 'scoped memory for tpu_custom_call.1']
    #allocation4 [shape = 's32[1]{0}', space=sflag, size = 0x4, scoped, tag = 'scoped memory for tpu_custom_call.1']
    #allocation5 [shape = 'u8[8192]{0}', space=vmem, size = 0x2000, scoped, tag = 'input window, operand 1, single buffered']
    #allocation6 [shape = 's32[1]{0}', space=sflag, size = 0x4, scoped, tag = 'scoped memory for tpu_custom_call.1']
    #allocation7 [shape = 'u8[294912]{0}', space=vmem, size = 0x48000, scoped, tag = 'input window, operand 2, single buffered']
    #allocation8 [shape = 'u8[8192]{0}', space=vmem, size = 0x2000, scoped, tag = 'output window, operand 0, single buffered']
    %8 = vsyncpa [#allocation3], 0
    %9 = vsyncpa [#allocation6], 0
    %10 = vsyncpa [#allocation4], 0
    // Predicated region
    $region2: #{tpu_custom_call.1} parent=1 // pred_check
      _
    $region3: #{tpu_custom_call.1} parent=1 // pred_check_branch
      %12 = sbr.rel (0) target = $region5
    $region4: #{tpu_custom_call.1} parent=1 // pred_region
      %s14 = ssub.s32 256, 256
      %15 = vsyncadd [#allocation3], %s14
      %s17 = sshll.u32 [#allocation2], 4
      %s18 = int_to_ptr.vmem [resolvable:$true] %s17
      %20 = dma.hbm_to_vmem [thread:$0]  %s0, 256, %s18, [#allocation3]
    $region5: #{tpu_custom_call.1} parent=1 // pred_fallthru
      _
    // Predicated region
    $region6: #{tpu_custom_call.1} parent=1 // pred_check
      _
    $region7: #{tpu_custom_call.1} parent=1 // pred_check_branch
      %22 = sbr.rel (0) target = $region9
    $region8: #{tpu_custom_call.1} parent=1 // pred_region
      %s24 = ssub.s32 256, 256
      %25 = vsyncadd [#allocation6], %s24
      %s26 = sshll.u32 [#allocation5], 4
      %s27 = int_to_ptr.vmem [resolvable:$true] %s26
      %32 = dma.hbm_to_vmem [thread:$0]  %s1, 256, %s27, [#allocation6], 128, 128, 8
    $region9: #{tpu_custom_call.1} parent=1 // pred_fallthru
      _
    // Predicated region
    $region10: #{tpu_custom_call.1} parent=1 // pred_check
      _
    $region11: #{tpu_custom_call.1} parent=1 // pred_check_branch
      %34 = sbr.rel (0) target = $region13
    $region12: #{tpu_custom_call.1} parent=1 // pred_region
      %s36 = ssub.s32 9216, 9216
      %37 = vsyncadd [#allocation6], %s36
      %s38 = sshll.u32 [#allocation7], 4
      %s39 = int_to_ptr.vmem [resolvable:$true] %s38
      %44 = dma.hbm_to_vmem [thread:$0]  %s2, 9216, %s39, [#allocation6], 512, 512, 32
    $region13: #{tpu_custom_call.1} parent=1 // pred_fallthru
      _
    // Predicated region
    $region14: #{tpu_custom_call.1} parent=1 // pred_check
      _
    $region15: #{tpu_custom_call.1} parent=1 // pred_check_branch
      %46 = sbr.rel (0) target = $region17
    $region16: #{tpu_custom_call.1} parent=1 // pred_region
      %47 = dma.done [#allocation3], 256
    $region17: #{tpu_custom_call.1} parent=1 // pred_fallthru
      _
    // Predicated region
    $region18: #{tpu_custom_call.1} parent=1 // pred_check
      _
    $region19: #{tpu_custom_call.1} parent=1 // pred_check_branch
      %49 = sbr.rel (0) target = $region21
    $region20: #{tpu_custom_call.1} parent=1 // pred_region
      %50 = dma.done [#allocation6], 256
    $region21: #{tpu_custom_call.1} parent=1 // pred_fallthru
      _
    // Predicated region
    $region22: #{tpu_custom_call.1} parent=1 // pred_check
      _
    $region23: #{tpu_custom_call.1} parent=1 // pred_check_branch
      %52 = sbr.rel (0) target = $region25
    $region24: #{tpu_custom_call.1} parent=1 // pred_region
      %53 = dma.done [#allocation6], 9216
    $region25: #{tpu_custom_call.1} parent=1 // pred_fallthru
      _
    %v54 = vld [vmem:[#allocation2] sm:$0xff]
    %v55 = vld [vmem:[#allocation2 + $0x8] sm:$0xff]
    %v56 = vld [vmem:[#allocation5] sm:$0xff]
    %v57 = vld [vmem:[#allocation5 + $0x8] sm:$0xf]
    %v58 = vmax.f32 %v54, 0.0
    %v59 = vmax.f32 %v55, 0.0
    %61 = vset.pattern.permute.xlu0 4
    %62 = vperm.xlu0 %61, %v56
    %v63 = vpop.permute.xlu0 %62
    %65 = vset.pattern.permute.xlu0 0
    %66 = vperm.xlu0 %65, %v56
    %v67 = vpop.permute.xlu0 %66
    %v71 = vlaneseq
    %v72 = vshrl.u32 %v71, 7
    %v73 = vsub.s32 0, %v72
    %v74 = vrot.slane %v58, %v73
    %v75 = vlaneseq
    %v76 = vshrl.u32 %v75, 7
    %v77 = vsub.s32 4, %v76
    %v78 = vrot.slane %v58, %v77
    %v79 = vlaneseq
    %v80 = vshrl.u32 %v79, 7
    %v81 = vsub.s32 0, %v80
    %v82 = vrot.slane %v59, %v81
    %v83 = vlaneseq
    %v84 = vshrl.u32 %v83, 7
    %v85 = vsub.s32 4, %v84
    %v86 = vrot.slane %v59, %v85
    %v91 = vlaneseq
    %v92 = vshrl.u32 %v91, 7
    %v93 = vsub.s32 0, %v92
    %v94 = vrot.slane %v74, %v93
    %v95 = vlaneseq
    %v96 = vshrl.u32 %v95, 7
    %v97 = vsub.s32 0, %v96
    %v98 = vrot.slane %v78, %v97
    %v99 = vlaneseq
    %v100 = vshrl.u32 %v99, 7
    %v101 = vsub.s32 0, %v100
    %v102 = vrot.slane %v82, %v101
    %v103 = vlaneseq
    %v104 = vshrl.u32 %v103, 7
    %v105 = vsub.s32 0, %v104
    %v106 = vrot.slane %v86, %v105
    %v107 = vmul.f32 %v67, %v94
    %v108 = vmul.f32 %v67, %v98
    %v109 = vmul.f32 %v67, %v102
    %v110 = vmul.f32 %v67, %v106
    %v111 = vadd.f32 %v63, %v107
    %v112 = vadd.f32 %v63, %v108
    %v113 = vadd.f32 %v63, %v109
    %v114 = vadd.f32 %v63, %v110
    %115 = vset.pattern.permute.xlu0 1
    %116 = vperm.xlu0 %115, %v56
    %v117 = vpop.permute.xlu0 %116
    %v119 = vlaneseq
    %v120 = vshrl.u32 %v119, 7
    %v121 = vsub.s32 1, %v120
    %v122 = vrot.slane %v58, %v121
    %v123 = vlaneseq
    %v124 = vshrl.u32 %v123, 7
    %v125 = vsub.s32 5, %v124
    %v126 = vrot.slane %v58, %v125
    %v127 = vlaneseq
    %v128 = vshrl.u32 %v127, 7
    %v129 = vsub.s32 1, %v128
    %v130 = vrot.slane %v59, %v129
    %v131 = vlaneseq
    %v132 = vshrl.u32 %v131, 7
    %v133 = vsub.s32 5, %v132
    %v134 = vrot.slane %v59, %v133
    %v139 = vlaneseq
    %v140 = vshrl.u32 %v139, 7
    %v141 = vsub.s32 1, %v140
    %v142 = vrot.slane %v122, %v141
    %v143 = vlaneseq
    %v144 = vshrl.u32 %v143, 7
    %v145 = vsub.s32 1, %v144
    %v146 = vrot.slane %v126, %v145
    %v147 = vlaneseq
    %v148 = vshrl.u32 %v147, 7
    %v149 = vsub.s32 1, %v148
    %v150 = vrot.slane %v130, %v149
    %v151 = vlaneseq
    %v152 = vshrl.u32 %v151, 7
    %v153 = vsub.s32 1, %v152
    %v154 = vrot.slane %v134, %v153
    %v155 = vmul.f32 %v117, %v142
    %v156 = vmul.f32 %v117, %v146
    %v157 = vmul.f32 %v117, %v150
    %v158 = vmul.f32 %v117, %v154
    %v159 = vadd.f32 %v111, %v155
    %v160 = vadd.f32 %v112, %v156
    %v161 = vadd.f32 %v113, %v157
    %v162 = vadd.f32 %v114, %v158
    %163 = vset.pattern.permute.xlu0 2
    %164 = vperm.xlu0 %163, %v56
    %v165 = vpop.permute.xlu0 %164
    %v167 = vlaneseq
    %v168 = vshrl.u32 %v167, 7
    %v169 = vsub.s32 2, %v168
    %v170 = vrot.slane %v58, %v169
    %v171 = vlaneseq
    %v172 = vshrl.u32 %v171, 7
    %v173 = vsub.s32 6, %v172
    %v174 = vrot.slane %v58, %v173
    %v175 = vlaneseq
    %v176 = vshrl.u32 %v175, 7
    %v177 = vsub.s32 2, %v176
    %v178 = vrot.slane %v59, %v177
    %v179 = vlaneseq
    %v180 = vshrl.u32 %v179, 7
    %v181 = vsub.s32 6, %v180
    %v182 = vrot.slane %v59, %v181
    %v187 = vlaneseq
    %v188 = vshrl.u32 %v187, 7
    %v189 = vsub.s32 2, %v188
    %v190 = vrot.slane %v170, %v189
    %v191 = vlaneseq
    %v192 = vshrl.u32 %v191, 7
    %v193 = vsub.s32 2, %v192
    %v194 = vrot.slane %v174, %v193
    %v195 = vlaneseq
    %v196 = vshrl.u32 %v195, 7
    %v197 = vsub.s32 2, %v196
    %v198 = vrot.slane %v178, %v197
    %v199 = vlaneseq
    %v200 = vshrl.u32 %v199, 7
    %v201 = vsub.s32 2, %v200
    %v202 = vrot.slane %v182, %v201
    %v203 = vmul.f32 %v165, %v190
    %v204 = vmul.f32 %v165, %v194
    %v205 = vmul.f32 %v165, %v198
    %v206 = vmul.f32 %v165, %v202
    %v207 = vadd.f32 %v159, %v203
    %v208 = vadd.f32 %v160, %v204
    %v209 = vadd.f32 %v161, %v205
    %v210 = vadd.f32 %v162, %v206
    %211 = vset.pattern.permute.xlu0 3
    %212 = vperm.xlu0 %211, %v56
    %v213 = vpop.permute.xlu0 %212
    %v215 = vlaneseq
    %v216 = vshrl.u32 %v215, 7
    %v217 = vsub.s32 3, %v216
    %v218 = vrot.slane %v58, %v217
    %v219 = vlaneseq
    %v220 = vshrl.u32 %v219, 7
    %v221 = vsub.s32 7, %v220
    %v222 = vrot.slane %v58, %v221
    %v223 = vlaneseq
    %v224 = vshrl.u32 %v223, 7
    %v225 = vsub.s32 3, %v224
    %v226 = vrot.slane %v59, %v225
    %v227 = vlaneseq
    %v228 = vshrl.u32 %v227, 7
    %v229 = vsub.s32 7, %v228
    %v230 = vrot.slane %v59, %v229
    %v235 = vlaneseq
    %v236 = vshrl.u32 %v235, 7
    %v237 = vsub.s32 3, %v236
    %v238 = vrot.slane %v218, %v237
    %v239 = vlaneseq
    %v240 = vshrl.u32 %v239, 7
    %v241 = vsub.s32 3, %v240
    %v242 = vrot.slane %v222, %v241
    %v243 = vlaneseq
    %v244 = vshrl.u32 %v243, 7
    %v245 = vsub.s32 3, %v244
    %v246 = vrot.slane %v226, %v245
    %v247 = vlaneseq
    %v248 = vshrl.u32 %v247, 7
    %v249 = vsub.s32 3, %v248
    %v250 = vrot.slane %v230, %v249
    %v251 = vmul.f32 %v213, %v238
    %v252 = vmul.f32 %v213, %v242
    %v253 = vmul.f32 %v213, %v246
    %v254 = vmul.f32 %v213, %v250
    %v255 = vadd.f32 %v207, %v251
    %v256 = vadd.f32 %v208, %v252
    %v257 = vadd.f32 %v209, %v253
    %v258 = vadd.f32 %v210, %v254
    %259 = vset.pattern.permute.xlu0 5
    %260 = vperm.xlu0 %259, %v56
    %v261 = vpop.permute.xlu0 %260
    %263 = vrot.lane.b32.xlu0 %v255, 17
    %v264 = vpop.permute.xlu0 %263
    %265 = vrot.lane.b32.xlu0 %v256, 17
    %v266 = vpop.permute.xlu0 %265
    %267 = vrot.lane.b32.xlu0 %v257, 17
    %v268 = vpop.permute.xlu0 %267
    %269 = vrot.lane.b32.xlu0 %v258, 17
    %v270 = vpop.permute.xlu0 %269
    %v271 = vlaneseq
    %v272 = vand.u32 %v271, 127
    %vm273 = vcmp.lt.s32.totalorder %v272, 17
    %v274 = vsel %vm273, %v268, %v270
    %v275 = vsel %vm273, %v266, %v268
    %v276 = vsel %vm273, %v264, %v266
    %v277 = vsel %vm273, %v270, %v264
    %v278 = vld [vmem:[#allocation7] sm:$0xff]
    %v279 = vld [vmem:[#allocation7 + $0x8] sm:$0xff]
    %v280 = vld [vmem:[#allocation7 + $0x10] sm:$0xff]
    %v281 = vld [vmem:[#allocation7 + $0x18] sm:$0xff]
    %v282 = vmul.f32 %v277, %v278
    %v283 = vmul.f32 %v276, %v279
    %v284 = vmul.f32 %v275, %v280
    %v285 = vmul.f32 %v274, %v281
    %v286 = vadd.f32 %v261, %v282
    %v287 = vadd.f32 %v261, %v283
    %v288 = vadd.f32 %v261, %v284
    %v289 = vadd.f32 %v261, %v285
    %290 = vrot.lane.b32.xlu0 %v255, 16
    %v291 = vpop.permute.xlu0 %290
    %292 = vrot.lane.b32.xlu0 %v256, 16
    %v293 = vpop.permute.xlu0 %292
    %294 = vrot.lane.b32.xlu0 %v257, 16
    %v295 = vpop.permute.xlu0 %294
    %296 = vrot.lane.b32.xlu0 %v258, 16
    %v297 = vpop.permute.xlu0 %296
    %vm298 = vcmp.lt.s32.totalorder %v272, 16
    %v299 = vsel %vm298, %v295, %v297
    %v300 = vsel %vm298, %v293, %v295
    %v301 = vsel %vm298, %v291, %v293
    %v302 = vsel %vm298, %v297, %v291
    %s303 = scalar_lea.vmem [#allocation7], 64
    %v304 = vld [vmem:[%s303] sm:$0xff]
    %v305 = vld [vmem:[%s303 + $0x8] sm:$0xff]
    %v306 = vld [vmem:[%s303 + $0x10] sm:$0xff]
    %v307 = vld [vmem:[%s303 + $0x18] sm:$0xff]
    %v308 = vmul.f32 %v302, %v304
    %v309 = vmul.f32 %v301, %v305
    %v310 = vmul.f32 %v300, %v306
    %v311 = vmul.f32 %v299, %v307
    %312 = vrot.lane.b32.xlu0 %v255, 15
    %v313 = vpop.permute.xlu0 %312
    %314 = vrot.lane.b32.xlu0 %v256, 15
    %v315 = vpop.permute.xlu0 %314
    %316 = vrot.lane.b32.xlu0 %v257, 15
    %v317 = vpop.permute.xlu0 %316
    %318 = vrot.lane.b32.xlu0 %v258, 15
    %v319 = vpop.permute.xlu0 %318
    %vm320 = vcmp.lt.s32.totalorder %v272, 15
    %v321 = vsel %vm320, %v317, %v319
    %v322 = vsel %vm320, %v315, %v317
    %v323 = vsel %vm320, %v313, %v315
    %v324 = vsel %vm320, %v319, %v313
    %s325 = scalar_lea.vmem [#allocation7], 128
    %v326 = vld [vmem:[%s325] sm:$0xff]
    %v327 = vld [vmem:[%s325 + $0x8] sm:$0xff]
    %v328 = vld [vmem:[%s325 + $0x10] sm:$0xff]
    %v329 = vld [vmem:[%s325 + $0x18] sm:$0xff]
    %v330 = vmul.f32 %v324, %v326
    %v331 = vmul.f32 %v323, %v327
    %v332 = vmul.f32 %v322, %v328
    %v333 = vmul.f32 %v321, %v329
    %334 = vrot.lane.b32.xlu0 %v255, 1
    %v335 = vpop.permute.xlu0 %334
    %336 = vrot.lane.b32.xlu0 %v256, 1
    %v337 = vpop.permute.xlu0 %336
    %338 = vrot.lane.b32.xlu0 %v257, 1
    %v339 = vpop.permute.xlu0 %338
    %340 = vrot.lane.b32.xlu0 %v258, 1
    %v341 = vpop.permute.xlu0 %340
    %vm342 = vcmp.lt.s32.totalorder %v272, 1
    %v343 = vsel %vm342, %v339, %v341
    %v344 = vsel %vm342, %v337, %v339
    %v345 = vsel %vm342, %v335, %v337
    %v346 = vsel %vm342, %v341, %v335
    %s347 = scalar_lea.vmem [#allocation7], 192
    %v348 = vld [vmem:[%s347] sm:$0xff]
    %v349 = vld [vmem:[%s347 + $0x8] sm:$0xff]
    %v350 = vld [vmem:[%s347 + $0x10] sm:$0xff]
    %v351 = vld [vmem:[%s347 + $0x18] sm:$0xff]
    %v352 = vmul.f32 %v346, %v348
    %v353 = vmul.f32 %v345, %v349
    %v354 = vmul.f32 %v344, %v350
    %v355 = vmul.f32 %v343, %v351
    %v356 = vadd.f32 %v286, %v352
    %v357 = vadd.f32 %v287, %v353
    %v358 = vadd.f32 %v288, %v354
    %v359 = vadd.f32 %v289, %v355
    %s360 = scalar_lea.vmem [#allocation7], 256
    %v361 = vld [vmem:[%s360] sm:$0xff]
    %v362 = vld [vmem:[%s360 + $0x8] sm:$0xff]
    %v363 = vld [vmem:[%s360 + $0x10] sm:$0xff]
    %v364 = vld [vmem:[%s360 + $0x18] sm:$0xff]
    %v365 = vmul.f32 %v255, %v361
    %v366 = vmul.f32 %v256, %v362
    %v367 = vmul.f32 %v257, %v363
    %v368 = vmul.f32 %v258, %v364
    %v369 = vadd.f32 %v308, %v365
    %v370 = vadd.f32 %v309, %v366
    %v371 = vadd.f32 %v310, %v367
    %v372 = vadd.f32 %v311, %v368
    %373 = vrot.lane.b32.xlu0 %v255, 127
    %v374 = vpop.permute.xlu0 %373
    %375 = vrot.lane.b32.xlu0 %v256, 127
    %v376 = vpop.permute.xlu0 %375
    %377 = vrot.lane.b32.xlu0 %v257, 127
    %v378 = vpop.permute.xlu0 %377
    %379 = vrot.lane.b32.xlu0 %v258, 127
    %v380 = vpop.permute.xlu0 %379
    %vm381 = vcmp.lt.s32.totalorder %v272, 127
    %v382 = vsel %vm381, %v378, %v380
    %v383 = vsel %vm381, %v376, %v378
    %v384 = vsel %vm381, %v374, %v376
    %v385 = vsel %vm381, %v380, %v374
    %s386 = scalar_lea.vmem [#allocation7], 320
    %v387 = vld [vmem:[%s386] sm:$0xff]
    %v388 = vld [vmem:[%s386 + $0x8] sm:$0xff]
    %v389 = vld [vmem:[%s386 + $0x10] sm:$0xff]
    %v390 = vld [vmem:[%s386 + $0x18] sm:$0xff]
    %v391 = vmul.f32 %v384, %v387
    %v392 = vmul.f32 %v383, %v388
    %v393 = vmul.f32 %v382, %v389
    %v394 = vmul.f32 %v385, %v390
    %v395 = vadd.f32 %v330, %v391
    %v396 = vadd.f32 %v331, %v392
    %v397 = vadd.f32 %v332, %v393
    %v398 = vadd.f32 %v333, %v394
    %399 = vrot.lane.b32.xlu0 %v255, 113
    %v400 = vpop.permute.xlu0 %399
    %401 = vrot.lane.b32.xlu0 %v256, 113
    %v402 = vpop.permute.xlu0 %401
    %403 = vrot.lane.b32.xlu0 %v257, 113
    %v404 = vpop.permute.xlu0 %403
    %405 = vrot.lane.b32.xlu0 %v258, 113
    %v406 = vpop.permute.xlu0 %405
    %vm407 = vcmp.lt.s32.totalorder %v272, 113
    %v408 = vsel %vm407, %v404, %v406
    %v409 = vsel %vm407, %v402, %v404
    %v410 = vsel %vm407, %v400, %v402
    %v411 = vsel %vm407, %v406, %v400
    %s412 = scalar_lea.vmem [#allocation7], 384
    %v413 = vld [vmem:[%s412] sm:$0xff]
    %v414 = vld [vmem:[%s412 + $0x8] sm:$0xff]
    %v415 = vld [vmem:[%s412 + $0x10] sm:$0xff]
    %v416 = vld [vmem:[%s412 + $0x18] sm:$0xff]
    %v417 = vmul.f32 %v410, %v413
    %v418 = vmul.f32 %v409, %v414
    %v419 = vmul.f32 %v408, %v415
    %v420 = vmul.f32 %v411, %v416
    %v421 = vadd.f32 %v356, %v417
    %v422 = vadd.f32 %v357, %v418
    %v423 = vadd.f32 %v358, %v419
    %v424 = vadd.f32 %v359, %v420
    %425 = vrot.lane.b32.xlu0 %v255, 112
    %v426 = vpop.permute.xlu0 %425
    %427 = vrot.lane.b32.xlu0 %v256, 112
    %v428 = vpop.permute.xlu0 %427
    %429 = vrot.lane.b32.xlu0 %v257, 112
    %v430 = vpop.permute.xlu0 %429
    %431 = vrot.lane.b32.xlu0 %v258, 112
    %v432 = vpop.permute.xlu0 %431
    %vm433 = vcmp.lt.s32.totalorder %v272, 112
    %v434 = vsel %vm433, %v430, %v432
    %v435 = vsel %vm433, %v428, %v430
    %v436 = vsel %vm433, %v426, %v428
    %v437 = vsel %vm433, %v432, %v426
    %s438 = scalar_lea.vmem [#allocation7], 448
    %v439 = vld [vmem:[%s438] sm:$0xff]
    %v440 = vld [vmem:[%s438 + $0x8] sm:$0xff]
    %v441 = vld [vmem:[%s438 + $0x10] sm:$0xff]
    %v442 = vld [vmem:[%s438 + $0x18] sm:$0xff]
    %v443 = vmul.f32 %v436, %v439
    %v444 = vmul.f32 %v435, %v440
    %v445 = vmul.f32 %v434, %v441
    %v446 = vmul.f32 %v437, %v442
    %v447 = vadd.f32 %v369, %v443
    %v448 = vadd.f32 %v370, %v444
    %v449 = vadd.f32 %v371, %v445
    %v450 = vadd.f32 %v372, %v446
    %451 = vrot.lane.b32.xlu0 %v255, 111
    %v452 = vpop.permute.xlu0 %451
    %453 = vrot.lane.b32.xlu0 %v256, 111
    %v454 = vpop.permute.xlu0 %453
    %455 = vrot.lane.b32.xlu0 %v257, 111
    %v456 = vpop.permute.xlu0 %455
    %457 = vrot.lane.b32.xlu0 %v258, 111
    %v458 = vpop.permute.xlu0 %457
    %vm459 = vcmp.lt.s32.totalorder %v272, 111
    %v460 = vsel %vm459, %v456, %v458
    %v461 = vsel %vm459, %v454, %v456
    %v462 = vsel %vm459, %v452, %v454
    %v463 = vsel %vm459, %v458, %v452
    %s464 = scalar_lea.vmem [#allocation7], 512
    %v465 = vld [vmem:[%s464] sm:$0xff]
    %v466 = vld [vmem:[%s464 + $0x8] sm:$0xff]
    %v467 = vld [vmem:[%s464 + $0x10] sm:$0xff]
    %v468 = vld [vmem:[%s464 + $0x18] sm:$0xff]
    %v469 = vmul.f32 %v462, %v465
    %v470 = vmul.f32 %v461, %v466
    %v471 = vmul.f32 %v460, %v467
    %v472 = vmul.f32 %v463, %v468
    %v473 = vadd.f32 %v395, %v469
    %v474 = vadd.f32 %v396, %v470
    %v475 = vadd.f32 %v397, %v471
    %v476 = vadd.f32 %v398, %v472
    %v477 = vadd.f32 %v447, %v473
    %v478 = vadd.f32 %v448, %v474
    %v479 = vadd.f32 %v449, %v475
    %v480 = vadd.f32 %v450, %v476
    %v481 = vadd.f32 %v421, %v477
    %v482 = vadd.f32 %v422, %v478
    %v483 = vadd.f32 %v423, %v479
    %v484 = vadd.f32 %v424, %v480
    %v485 = vmax.f32 %v481, 0.0
    %v486 = vmax.f32 %v482, 0.0
    %v487 = vmax.f32 %v483, 0.0
    %v488 = vmax.f32 %v484, 0.0
    %490 = vset.pattern.permute.xlu0 8
    %491 = vperm.xlu0 %490, %v57
    %v492 = vpop.permute.xlu0 %491
    %494 = vset.pattern.permute.xlu0 0
    %495 = vperm.xlu0 %494, %v57
    %v496 = vpop.permute.xlu0 %495
    %v498 = vlaneseq
    %v499 = vshrl.u32 %v498, 7
    %v500 = vsub.s32 0, %v499
    %v501 = vrot.slane %v485, %v500
    %v502 = vlaneseq
    %v503 = vshrl.u32 %v502, 7
    %v504 = vsub.s32 0, %v503
    %v505 = vrot.slane %v486, %v504
    %v506 = vlaneseq
    %v507 = vshrl.u32 %v506, 7
    %v508 = vsub.s32 0, %v507
    %v509 = vrot.slane %v487, %v508
    %v510 = vlaneseq
    %v511 = vshrl.u32 %v510, 7
    %v512 = vsub.s32 0, %v511
    %v513 = vrot.slane %v488, %v512
    %v514 = vmul.f32 %v496, %v501
    %v515 = vmul.f32 %v496, %v505
    %v516 = vmul.f32 %v496, %v509
    %v517 = vmul.f32 %v496, %v513
    %v518 = vadd.f32 %v492, %v514
    %v519 = vadd.f32 %v492, %v515
    %v520 = vadd.f32 %v492, %v516
    %v521 = vadd.f32 %v492, %v517
    %522 = vset.pattern.permute.xlu0 1
    %523 = vperm.xlu0 %522, %v57
    %v524 = vpop.permute.xlu0 %523
    %v526 = vlaneseq
    %v527 = vshrl.u32 %v526, 7
    %v528 = vsub.s32 1, %v527
    %v529 = vrot.slane %v485, %v528
    %v530 = vlaneseq
    %v531 = vshrl.u32 %v530, 7
    %v532 = vsub.s32 1, %v531
    %v533 = vrot.slane %v486, %v532
    %v534 = vlaneseq
    %v535 = vshrl.u32 %v534, 7
    %v536 = vsub.s32 1, %v535
    %v537 = vrot.slane %v487, %v536
    %v538 = vlaneseq
    %v539 = vshrl.u32 %v538, 7
    %v540 = vsub.s32 1, %v539
    %v541 = vrot.slane %v488, %v540
    %v542 = vmul.f32 %v524, %v529
    %v543 = vmul.f32 %v524, %v533
    %v544 = vmul.f32 %v524, %v537
    %v545 = vmul.f32 %v524, %v541
    %v546 = vadd.f32 %v518, %v542
    %v547 = vadd.f32 %v519, %v543
    %v548 = vadd.f32 %v520, %v544
    %v549 = vadd.f32 %v521, %v545
    %550 = vset.pattern.permute.xlu0 2
    %551 = vperm.xlu0 %550, %v57
    %v552 = vpop.permute.xlu0 %551
    %v554 = vlaneseq
    %v555 = vshrl.u32 %v554, 7
    %v556 = vsub.s32 2, %v555
    %v557 = vrot.slane %v485, %v556
    %v558 = vlaneseq
    %v559 = vshrl.u32 %v558, 7
    %v560 = vsub.s32 2, %v559
    %v561 = vrot.slane %v486, %v560
    %v562 = vlaneseq
    %v563 = vshrl.u32 %v562, 7
    %v564 = vsub.s32 2, %v563
    %v565 = vrot.slane %v487, %v564
    %v566 = vlaneseq
    %v567 = vshrl.u32 %v566, 7
    %v568 = vsub.s32 2, %v567
    %v569 = vrot.slane %v488, %v568
    %v570 = vmul.f32 %v552, %v557
    %v571 = vmul.f32 %v552, %v561
    %v572 = vmul.f32 %v552, %v565
    %v573 = vmul.f32 %v552, %v569
    %v574 = vadd.f32 %v546, %v570
    %v575 = vadd.f32 %v547, %v571
    %v576 = vadd.f32 %v548, %v572
    %v577 = vadd.f32 %v549, %v573
    %578 = vset.pattern.permute.xlu0 3
    %579 = vperm.xlu0 %578, %v57
    %v580 = vpop.permute.xlu0 %579
    %v582 = vlaneseq
    %v583 = vshrl.u32 %v582, 7
    %v584 = vsub.s32 3, %v583
    %v585 = vrot.slane %v485, %v584
    %v586 = vlaneseq
    %v587 = vshrl.u32 %v586, 7
    %v588 = vsub.s32 3, %v587
    %v589 = vrot.slane %v486, %v588
    %v590 = vlaneseq
    %v591 = vshrl.u32 %v590, 7
    %v592 = vsub.s32 3, %v591
    %v593 = vrot.slane %v487, %v592
    %v594 = vlaneseq
    %v595 = vshrl.u32 %v594, 7
    %v596 = vsub.s32 3, %v595
    %v597 = vrot.slane %v488, %v596
    %v598 = vmul.f32 %v580, %v585
    %v599 = vmul.f32 %v580, %v589
    %v600 = vmul.f32 %v580, %v593
    %v601 = vmul.f32 %v580, %v597
    %v602 = vadd.f32 %v574, %v598
    %v603 = vadd.f32 %v575, %v599
    %v604 = vadd.f32 %v576, %v600
    %v605 = vadd.f32 %v577, %v601
    %606 = vset.pattern.permute.xlu0 4
    %607 = vperm.xlu0 %606, %v57
    %v608 = vpop.permute.xlu0 %607
    %v610 = vlaneseq
    %v611 = vshrl.u32 %v610, 7
    %v612 = vsub.s32 4, %v611
    %v613 = vrot.slane %v485, %v612
    %v614 = vlaneseq
    %v615 = vshrl.u32 %v614, 7
    %v616 = vsub.s32 4, %v615
    %v617 = vrot.slane %v486, %v616
    %v618 = vlaneseq
    %v619 = vshrl.u32 %v618, 7
    %v620 = vsub.s32 4, %v619
    %v621 = vrot.slane %v487, %v620
    %v622 = vlaneseq
    %v623 = vshrl.u32 %v622, 7
    %v624 = vsub.s32 4, %v623
    %v625 = vrot.slane %v488, %v624
    %v626 = vmul.f32 %v608, %v613
    %v627 = vmul.f32 %v608, %v617
    %v628 = vmul.f32 %v608, %v621
    %v629 = vmul.f32 %v608, %v625
    %v630 = vadd.f32 %v602, %v626
    %v631 = vadd.f32 %v603, %v627
    %v632 = vadd.f32 %v604, %v628
    %v633 = vadd.f32 %v605, %v629
    %634 = vset.pattern.permute.xlu0 5
    %635 = vperm.xlu0 %634, %v57
    %v636 = vpop.permute.xlu0 %635
    %v638 = vlaneseq
    %v639 = vshrl.u32 %v638, 7
    %v640 = vsub.s32 5, %v639
    %v641 = vrot.slane %v485, %v640
    %v642 = vlaneseq
    %v643 = vshrl.u32 %v642, 7
    %v644 = vsub.s32 5, %v643
    %v645 = vrot.slane %v486, %v644
    %v646 = vlaneseq
    %v647 = vshrl.u32 %v646, 7
    %v648 = vsub.s32 5, %v647
    %v649 = vrot.slane %v487, %v648
    %v650 = vlaneseq
    %v651 = vshrl.u32 %v650, 7
    %v652 = vsub.s32 5, %v651
    %v653 = vrot.slane %v488, %v652
    %v654 = vmul.f32 %v636, %v641
    %v655 = vmul.f32 %v636, %v645
    %v656 = vmul.f32 %v636, %v649
    %v657 = vmul.f32 %v636, %v653
    %v658 = vadd.f32 %v630, %v654
    %v659 = vadd.f32 %v631, %v655
    %v660 = vadd.f32 %v632, %v656
    %v661 = vadd.f32 %v633, %v657
    %662 = vset.pattern.permute.xlu0 6
    %663 = vperm.xlu0 %662, %v57
    %v664 = vpop.permute.xlu0 %663
    %v666 = vlaneseq
    %v667 = vshrl.u32 %v666, 7
    %v668 = vsub.s32 6, %v667
    %v669 = vrot.slane %v485, %v668
    %v670 = vlaneseq
    %v671 = vshrl.u32 %v670, 7
    %v672 = vsub.s32 6, %v671
    %v673 = vrot.slane %v486, %v672
    %v674 = vlaneseq
    %v675 = vshrl.u32 %v674, 7
    %v676 = vsub.s32 6, %v675
    %v677 = vrot.slane %v487, %v676
    %v678 = vlaneseq
    %v679 = vshrl.u32 %v678, 7
    %v680 = vsub.s32 6, %v679
    %v681 = vrot.slane %v488, %v680
    %v682 = vmul.f32 %v664, %v669
    %v683 = vmul.f32 %v664, %v673
    %v684 = vmul.f32 %v664, %v677
    %v685 = vmul.f32 %v664, %v681
    %v686 = vadd.f32 %v658, %v682
    %v687 = vadd.f32 %v659, %v683
    %v688 = vadd.f32 %v660, %v684
    %v689 = vadd.f32 %v661, %v685
    %690 = vset.pattern.permute.xlu0 7
    %691 = vperm.xlu0 %690, %v57
    %v692 = vpop.permute.xlu0 %691
    %v694 = vlaneseq
    %v695 = vshrl.u32 %v694, 7
    %v696 = vsub.s32 7, %v695
    %v697 = vrot.slane %v485, %v696
    %v698 = vlaneseq
    %v699 = vshrl.u32 %v698, 7
    %v700 = vsub.s32 7, %v699
    %v701 = vrot.slane %v486, %v700
    %v702 = vlaneseq
    %v703 = vshrl.u32 %v702, 7
    %v704 = vsub.s32 7, %v703
    %v705 = vrot.slane %v487, %v704
    %v706 = vlaneseq
    %v707 = vshrl.u32 %v706, 7
    %v708 = vsub.s32 7, %v707
    %v709 = vrot.slane %v488, %v708
    %v710 = vmul.f32 %v692, %v697
    %v711 = vmul.f32 %v692, %v701
    %v712 = vmul.f32 %v692, %v705
    %v713 = vmul.f32 %v692, %v709
    %v714 = vadd.f32 %v686, %v710
    %v715 = vadd.f32 %v687, %v711
    %v716 = vadd.f32 %v688, %v712
    %v717 = vadd.f32 %v689, %v713
    %718 = vset.pattern.permute.xlu0 9
    %719 = vperm.xlu0 %718, %v57
    %v720 = vpop.permute.xlu0 %719
    %722 = vrot.lane.b32.xlu0 %v714, 17
    %v723 = vpop.permute.xlu0 %722
    %724 = vrot.lane.b32.xlu0 %v715, 17
    %v725 = vpop.permute.xlu0 %724
    %726 = vrot.lane.b32.xlu0 %v716, 17
    %v727 = vpop.permute.xlu0 %726
    %728 = vrot.lane.b32.xlu0 %v717, 17
    %v729 = vpop.permute.xlu0 %728
    %v730 = vsel %vm273, %v727, %v729
    %v731 = vsel %vm273, %v725, %v727
    %v732 = vsel %vm273, %v723, %v725
    %v733 = vsel %vm273, %v729, %v723
    %v734 = vld [vmem:[#allocation7 + $0x20] sm:$0xf]
    %v735 = vld [vmem:[#allocation7 + $0x28] sm:$0xf]
    %v736 = vld [vmem:[#allocation7 + $0x30] sm:$0xf]
    %v737 = vld [vmem:[#allocation7 + $0x38] sm:$0xf]
    %v738 = vmul.f32 %v733, %v734
    %v739 = vmul.f32 %v732, %v735
    %v740 = vmul.f32 %v731, %v736
    %v741 = vmul.f32 %v730, %v737
    %v742 = vadd.f32 %v720, %v738
    %v743 = vadd.f32 %v720, %v739
    %v744 = vadd.f32 %v720, %v740
    %v745 = vadd.f32 %v720, %v741
    %746 = vrot.lane.b32.xlu0 %v714, 16
    %v747 = vpop.permute.xlu0 %746
    %748 = vrot.lane.b32.xlu0 %v715, 16
    %v749 = vpop.permute.xlu0 %748
    %750 = vrot.lane.b32.xlu0 %v716, 16
    %v751 = vpop.permute.xlu0 %750
    %752 = vrot.lane.b32.xlu0 %v717, 16
    %v753 = vpop.permute.xlu0 %752
    %v754 = vsel %vm298, %v751, %v753
    %v755 = vsel %vm298, %v749, %v751
    %v756 = vsel %vm298, %v747, %v749
    %v757 = vsel %vm298, %v753, %v747
    %v758 = vld [vmem:[%s303 + $0x20] sm:$0xf]
    %v759 = vld [vmem:[%s303 + $0x28] sm:$0xf]
    %v760 = vld [vmem:[%s303 + $0x30] sm:$0xf]
    %v761 = vld [vmem:[%s303 + $0x38] sm:$0xf]
    %v762 = vmul.f32 %v757, %v758
    %v763 = vmul.f32 %v756, %v759
    %v764 = vmul.f32 %v755, %v760
    %v765 = vmul.f32 %v754, %v761
    %766 = vrot.lane.b32.xlu0 %v714, 15
    %v767 = vpop.permute.xlu0 %766
    %768 = vrot.lane.b32.xlu0 %v715, 15
    %v769 = vpop.permute.xlu0 %768
    %770 = vrot.lane.b32.xlu0 %v716, 15
    %v771 = vpop.permute.xlu0 %770
    %772 = vrot.lane.b32.xlu0 %v717, 15
    %v773 = vpop.permute.xlu0 %772
    %v774 = vsel %vm320, %v771, %v773
    %v775 = vsel %vm320, %v769, %v771
    %v776 = vsel %vm320, %v767, %v769
    %v777 = vsel %vm320, %v773, %v767
    %v778 = vld [vmem:[%s325 + $0x20] sm:$0xf]
    %v779 = vld [vmem:[%s325 + $0x28] sm:$0xf]
    %v780 = vld [vmem:[%s325 + $0x30] sm:$0xf]
    %v781 = vld [vmem:[%s325 + $0x38] sm:$0xf]
    %v782 = vmul.f32 %v777, %v778
    %v783 = vmul.f32 %v776, %v779
    %v784 = vmul.f32 %v775, %v780
    %v785 = vmul.f32 %v774, %v781
    %786 = vrot.lane.b32.xlu0 %v714, 1
    %v787 = vpop.permute.xlu0 %786
    %788 = vrot.lane.b32.xlu0 %v715, 1
    %v789 = vpop.permute.xlu0 %788
    %790 = vrot.lane.b32.xlu0 %v716, 1
    %v791 = vpop.permute.xlu0 %790
    %792 = vrot.lane.b32.xlu0 %v717, 1
    %v793 = vpop.permute.xlu0 %792
    %v794 = vsel %vm342, %v791, %v793
    %v795 = vsel %vm342, %v789, %v791
    %v796 = vsel %vm342, %v787, %v789
    %v797 = vsel %vm342, %v793, %v787
    %v798 = vld [vmem:[%s347 + $0x20] sm:$0xf]
    %v799 = vld [vmem:[%s347 + $0x28] sm:$0xf]
    %v800 = vld [vmem:[%s347 + $0x30] sm:$0xf]
    %v801 = vld [vmem:[%s347 + $0x38] sm:$0xf]
    %v802 = vmul.f32 %v797, %v798
    %v803 = vmul.f32 %v796, %v799
    %v804 = vmul.f32 %v795, %v800
    %v805 = vmul.f32 %v794, %v801
    %v806 = vadd.f32 %v742, %v802
    %v807 = vadd.f32 %v743, %v803
    %v808 = vadd.f32 %v744, %v804
    %v809 = vadd.f32 %v745, %v805
    %v810 = vld [vmem:[%s360 + $0x20] sm:$0xf]
    %v811 = vld [vmem:[%s360 + $0x28] sm:$0xf]
    %v812 = vld [vmem:[%s360 + $0x30] sm:$0xf]
    %v813 = vld [vmem:[%s360 + $0x38] sm:$0xf]
    %v814 = vmul.f32 %v714, %v810
    %v815 = vmul.f32 %v715, %v811
    %v816 = vmul.f32 %v716, %v812
    %v817 = vmul.f32 %v717, %v813
    %v818 = vadd.f32 %v762, %v814
    %v819 = vadd.f32 %v763, %v815
    %v820 = vadd.f32 %v764, %v816
    %v821 = vadd.f32 %v765, %v817
    %822 = vrot.lane.b32.xlu0 %v714, 127
    %v823 = vpop.permute.xlu0 %822
    %824 = vrot.lane.b32.xlu0 %v715, 127
    %v825 = vpop.permute.xlu0 %824
    %826 = vrot.lane.b32.xlu0 %v716, 127
    %v827 = vpop.permute.xlu0 %826
    %828 = vrot.lane.b32.xlu0 %v717, 127
    %v829 = vpop.permute.xlu0 %828
    %v830 = vsel %vm381, %v827, %v829
    %v831 = vsel %vm381, %v825, %v827
    %v832 = vsel %vm381, %v823, %v825
    %v833 = vsel %vm381, %v829, %v823
    %v834 = vld [vmem:[%s386 + $0x20] sm:$0xf]
    %v835 = vld [vmem:[%s386 + $0x28] sm:$0xf]
    %v836 = vld [vmem:[%s386 + $0x30] sm:$0xf]
    %v837 = vld [vmem:[%s386 + $0x38] sm:$0xf]
    %v838 = vmul.f32 %v832, %v834
    %v839 = vmul.f32 %v831, %v835
    %v840 = vmul.f32 %v830, %v836
    %v841 = vmul.f32 %v833, %v837
    %v842 = vadd.f32 %v782, %v838
    %v843 = vadd.f32 %v783, %v839
    %v844 = vadd.f32 %v784, %v840
    %v845 = vadd.f32 %v785, %v841
    %846 = vrot.lane.b32.xlu0 %v714, 113
    %v847 = vpop.permute.xlu0 %846
    %848 = vrot.lane.b32.xlu0 %v715, 113
    %v849 = vpop.permute.xlu0 %848
    %850 = vrot.lane.b32.xlu0 %v716, 113
    %v851 = vpop.permute.xlu0 %850
    %852 = vrot.lane.b32.xlu0 %v717, 113
    %v853 = vpop.permute.xlu0 %852
    %v854 = vsel %vm407, %v851, %v853
    %v855 = vsel %vm407, %v849, %v851
    %v856 = vsel %vm407, %v847, %v849
    %v857 = vsel %vm407, %v853, %v847
    %v858 = vld [vmem:[%s412 + $0x20] sm:$0xf]
    %v859 = vld [vmem:[%s412 + $0x28] sm:$0xf]
    %v860 = vld [vmem:[%s412 + $0x30] sm:$0xf]
    %v861 = vld [vmem:[%s412 + $0x38] sm:$0xf]
    %v862 = vmul.f32 %v856, %v858
    %v863 = vmul.f32 %v855, %v859
    %v864 = vmul.f32 %v854, %v860
    %v865 = vmul.f32 %v857, %v861
    %v866 = vadd.f32 %v806, %v862
    %v867 = vadd.f32 %v807, %v863
    %v868 = vadd.f32 %v808, %v864
    %v869 = vadd.f32 %v809, %v865
    %870 = vrot.lane.b32.xlu0 %v714, 112
    %v871 = vpop.permute.xlu0 %870
    %872 = vrot.lane.b32.xlu0 %v715, 112
    %v873 = vpop.permute.xlu0 %872
    %874 = vrot.lane.b32.xlu0 %v716, 112
    %v875 = vpop.permute.xlu0 %874
    %876 = vrot.lane.b32.xlu0 %v717, 112
    %v877 = vpop.permute.xlu0 %876
    %v878 = vsel %vm433, %v875, %v877
    %v879 = vsel %vm433, %v873, %v875
    %v880 = vsel %vm433, %v871, %v873
    %v881 = vsel %vm433, %v877, %v871
    %v882 = vld [vmem:[%s438 + $0x20] sm:$0xf]
    %v883 = vld [vmem:[%s438 + $0x28] sm:$0xf]
    %v884 = vld [vmem:[%s438 + $0x30] sm:$0xf]
    %v885 = vld [vmem:[%s438 + $0x38] sm:$0xf]
    %v886 = vmul.f32 %v880, %v882
    %v887 = vmul.f32 %v879, %v883
    %v888 = vmul.f32 %v878, %v884
    %v889 = vmul.f32 %v881, %v885
    %v890 = vadd.f32 %v818, %v886
    %v891 = vadd.f32 %v819, %v887
    %v892 = vadd.f32 %v820, %v888
    %v893 = vadd.f32 %v821, %v889
    %894 = vrot.lane.b32.xlu0 %v714, 111
    %v895 = vpop.permute.xlu0 %894
    %896 = vrot.lane.b32.xlu0 %v715, 111
    %v897 = vpop.permute.xlu0 %896
    %898 = vrot.lane.b32.xlu0 %v716, 111
    %v899 = vpop.permute.xlu0 %898
    %900 = vrot.lane.b32.xlu0 %v717, 111
    %v901 = vpop.permute.xlu0 %900
    %v902 = vsel %vm459, %v899, %v901
    %v903 = vsel %vm459, %v897, %v899
    %v904 = vsel %vm459, %v895, %v897
    %v905 = vsel %vm459, %v901, %v895
    %v906 = vld [vmem:[%s464 + $0x20] sm:$0xf]
    %v907 = vld [vmem:[%s464 + $0x28] sm:$0xf]
    %v908 = vld [vmem:[%s464 + $0x30] sm:$0xf]
    %v909 = vld [vmem:[%s464 + $0x38] sm:$0xf]
    %v910 = vmul.f32 %v904, %v906
    %v911 = vmul.f32 %v903, %v907
    %v912 = vmul.f32 %v902, %v908
    %v913 = vmul.f32 %v905, %v909
    %v914 = vadd.f32 %v842, %v910
    %v915 = vadd.f32 %v843, %v911
    %v916 = vadd.f32 %v844, %v912
    %v917 = vadd.f32 %v845, %v913
    %v918 = vadd.f32 %v890, %v914
    %v919 = vadd.f32 %v891, %v915
    %v920 = vadd.f32 %v892, %v916
    %v921 = vadd.f32 %v893, %v917
    %v922 = vadd.f32 %v866, %v918
    %v923 = vadd.f32 %v867, %v919
    %v924 = vadd.f32 %v868, %v920
    %v925 = vadd.f32 %v869, %v921
    %v926 = vxor.u32 %v922, 2147483648
    %v927 = vxor.u32 %v923, 2147483648
    %v928 = vxor.u32 %v924, 2147483648
    %v929 = vxor.u32 %v925, 2147483648
    %v930 = vmul.f32 %v926, 1.442695
    %v931 = vpow.pop %v930
    %v932 = vmul.f32 %v927, 1.442695
    %v933 = vpow.pop %v932
    %v934 = vmul.f32 %v928, 1.442695
    %v935 = vpow.pop %v934
    %v936 = vmul.f32 %v929, 1.442695
    %v937 = vpow.pop %v936
    %v938 = vadd.f32 %v931, 1.0
    %v939 = vadd.f32 %v933, 1.0
    %v940 = vadd.f32 %v935, 1.0
    %v941 = vadd.f32 %v937, 1.0
    %v942 = vrcp.pop %v938
    %v943 = vmul.f32 1.0, %v942
    %v944 = vrcp.pop %v939
    %v945 = vmul.f32 1.0, %v944
    %v946 = vrcp.pop %v940
    %v947 = vmul.f32 1.0, %v946
    %v948 = vrcp.pop %v941
    %v949 = vmul.f32 1.0, %v948
    %v950 = vmul.f32 %v922, %v943
    %v951 = vmul.f32 %v923, %v945
    %v952 = vmul.f32 %v924, %v947
    %v953 = vmul.f32 %v925, %v949
    %v956 = vcombine.high %v54, %v54
    %v957 = vcombine.high %v55, %v55
    %v960 = vadd.f32 %v950, %v54
    %v961 = vadd.f32 %v951, %v956
    %v962 = vadd.f32 %v952, %v55
    %v963 = vadd.f32 %v953, %v957
    %v968 = vcombine.low %v960, %v961
    %v969 = vcombine.low %v962, %v963
    %972 = vst [vmem:[#allocation8] sm:$0xff] %v968
    %973 = vst [vmem:[#allocation8 + $0x8] sm:$0xff] %v969
    // Predicated region
    $region26: #{tpu_custom_call.1} parent=1 // pred_check
      _
    $region27: #{tpu_custom_call.1} parent=1 // pred_check_branch
      %975 = sbr.rel (0) target = $region29
    $region28: #{tpu_custom_call.1} parent=1 // pred_region
      %s977 = ssub.s32 256, 256
      %978 = vsyncadd [#allocation4], %s977
      %s980 = sshll.u32 [#allocation8], 4
      %s981 = int_to_ptr.vmem [resolvable:$true] %s980
      %983 = dma.vmem_to_hbm [thread:$0]  %s981, 256, %s3, [#allocation4]
    $region29: #{tpu_custom_call.1} parent=1 // pred_fallthru
      _
    // Predicated region
    $region30: #{tpu_custom_call.1} parent=1 // pred_check
      _
    $region31: #{tpu_custom_call.1} parent=1 // pred_check_branch
      %985 = sbr.rel (0) target = $region33
    $region32: #{tpu_custom_call.1} parent=1 // pred_region
      %986 = dma.done [#allocation4], 256
    $region33: #{tpu_custom_call.1} parent=1 // pred_fallthru
      _
    %987 = vsyncpa [#allocation3], 1
    %988 = vsyncpa [#allocation6], 1
    %989 = vsyncpa [#allocation4], 1

</llo_original>
